<compile_context>
chip_gen: v5e
topology: v5e:2x2
jax: 0.10.0
libtpu: 0.0.40
codegen_flags: <defaults>
</compile_context>

<pallas_src>
import jax
import jax.numpy as jnp
from jax.experimental import pallas as pl
from jax.experimental.pallas import tpu as pltpu


def _round_up(n, m):
    return ((n + m - 1) // m) * m


def _choose_tile_b(B, max_tile=2048):
    """Batch tile: as large as possible (per-grid-step overhead ~0.35us
    dominates these tiny matmuls), but split batches >=256 into >=2 tiles so
    the "parallel" batch axis can be sharded across both v7x TensorCores."""
    if B < 256:
        return B                                   # single full-dim tile
    return min(max_tile, _round_up(pl.cdiv(B, 2), 8))


def _make_kernel(num_layers, D, O, blk, C):
    """blk = rows per packed linear block (weights + bias row + zero pad),
    C = slab lane width (padded to >=128)."""

    def kernel(x_ref, p_ref, out_ref):
        # x_ref: (TB, D) f32, p_ref: (R, C) bf16, out_ref: (TB, C) f32
        x = x_ref[...]
        TB = x.shape[0]

        # Hoisted constants (JAX does not CSE broadcast_in_dim inside loops).
        # aug_tail = [1, 0, ..., 0] of width (blk - D): concatenated to x so a
        # single matmul against the full blk-row block folds the bias in.
        aug_tail = (jax.lax.broadcasted_iota(jnp.int32, (TB, blk - D), 1) == 0
                    ).astype(jnp.bfloat16)
        lane_id = jax.lax.broadcasted_iota(jnp.int32, (TB, C), 1)
        out_mask = lane_id < O                     # valid output lanes

        def layer_step(x, w):
            # w: (blk, C) bf16 block = [[Wn | Wg | 0]; [bn | bg | 0]; zeros]
            x_aug = jnp.concatenate([x.astype(w.dtype), aug_tail], axis=-1)
            y = jnp.dot(x_aug, w, preferred_element_type=jnp.float32)
            h = jnp.maximum(y[:, :D], 0.0)         # relu branch    (VPU)
            z = y[:, D:2 * D]
            g = 0.5 * (jnp.tanh(0.5 * z) + 1.0)    # sigmoid gate   (EUP tanh)
            # (If the h/z lane slices ever show up as VMEM copies in the bundle
            #  dump, realign with pltpu.roll(z, -D, axis=-1) instead.)
            return g * h + (1.0 - g) * x           # highway mix    (VPU)

        if num_layers <= 8:
            # Static unroll: full LLO scheduler visibility, low vreg pressure.
            for l in range(num_layers):
                x = layer_step(x, p_ref[l * blk:(l + 1) * blk, :])
        else:
            # Deep stacks: fori_loop + aligned dynamic slices cap live ranges.
            def body(l, xc):
                base = pl.multiple_of(l * blk, 16)
                return layer_step(xc, p_ref[pl.ds(base, blk), :])
            x = jax.lax.fori_loop(0, num_layers, body, x)

        # Output linear (bias folded the same way) + softmax over lanes [0, O).
        wo = p_ref[num_layers * blk:(num_layers + 1) * blk, :]
        x_aug = jnp.concatenate([x.astype(wo.dtype), aug_tail], axis=-1)
        logits = jnp.dot(x_aug, wo, preferred_element_type=jnp.float32)  # (TB, C)
        logits = jnp.where(out_mask, logits, -jnp.inf)   # pad lanes -> prob 0
        m = jnp.max(logits, axis=-1, keepdims=True)
        e = jnp.exp(logits - m)
        denom = jnp.sum(e, axis=-1, keepdims=True)
        probs = e * pl.reciprocal(denom, approx=True)    # EUP reciprocal
        out_ref[...] = probs.astype(out_ref.dtype)       # full-lane unmasked vst

    return kernel


def pack_params(wn, bn, wg, bg, wo, bo, dtype=jnp.bfloat16):
    """Pack all parameters into a single (R, C) slab (one HBM->VMEM DMA).

    Per-layer block (blk rows, blk = round_up(D+1, 16) for bf16 sublane tiles):
      rows [0, D) : [Wn | Wg]   (fused along columns)
      row  D      : [bn | bg]
      rest        : zero padding (folded-bias matmul sees exact zeros)
    Last block holds the output linear: rows[0,D)=Wo (cols [0,O)), row D = bo.
    Lanes are padded to C >= 128 so every slab load is a full 128-lane vld.
    """
    L, D, _ = wn.shape
    O = wo.shape[1]
    C = max(128, 2 * D, O)
    blk = _round_up(D + 1, 16)
    R = (L + 1) * blk

    slab = jnp.zeros((R, C), dtype=jnp.float32)
    for l in range(L):
        base = l * blk
        slab = slab.at[base:base + D, :D].set(wn[l])
        slab = slab.at[base:base + D, D:2 * D].set(wg[l])
        slab = slab.at[base + D, :D].set(bn[l, 0])
        slab = slab.at[base + D, D:2 * D].set(bg[l, 0])
    base = L * blk
    slab = slab.at[base:base + D, :O].set(wo)
    slab = slab.at[base + D, :O].set(bo[0])
    return slab.astype(dtype), blk


def highway_model(x, params, *, num_layers, output_size, blk):
    """x: (B, D) f32; params: packed (R, C) bf16 slab from pack_params."""
    B, D = x.shape
    R, C = params.shape
    O = output_size

    tile_b = _choose_tile_b(B)
    grid = (pl.cdiv(B, tile_b),)

    kernel = _make_kernel(num_layers, D, O, blk, C)
    out_padded = pl.pallas_call(
        kernel,
        out_shape=jax.ShapeDtypeStruct((B, C), jnp.float32),   # lane-dense output
        grid_spec=pltpu.PrefetchScalarGridSpec(
            num_scalar_prefetch=0,
            grid=grid,
            in_specs=[
                pl.BlockSpec((tile_b, D), lambda i: (i, 0)),   # batch-tiled acts
                pl.BlockSpec((R, C), lambda i: (0, 0)),        # whole slab, 1 DMA
            ],
            out_specs=pl.BlockSpec((tile_b, C), lambda i: (i, 0)),
        ),
        compiler_params=pltpu.CompilerParams(
            dimension_semantics=("parallel",)),                # shard batch over TCs
    )(x, params)
    return out_padded[:, :O]


def init_params(key, num_layers, input_size, output_size):
    """Deterministic parameter init (uniform +-1/sqrt(fan_in), like nn.Linear);
    gate biases filled with -2.0 as in the canonical HighwayMLP."""
    D, O = input_size, output_size
    ks = jax.random.split(key, 4)
    lim_d = 1.0 / jnp.sqrt(jnp.float32(D))

    wn = jax.random.uniform(ks[0], (num_layers, D, D), jnp.float32, -lim_d, lim_d)
    bn = jax.random.uniform(ks[1], (num_layers, 1, D), jnp.float32, -lim_d, lim_d)
    wg = jax.random.uniform(ks[2], (num_layers, D, D), jnp.float32, -lim_d, lim_d)
    bg = jnp.full((num_layers, 1, D), -2.0, dtype=jnp.float32)   # highway gate bias

    kw, kb = jax.random.split(ks[3])
    wo = jax.random.uniform(kw, (D, O), jnp.float32, -lim_d, lim_d)
    bo = jax.random.uniform(kb, (1, O), jnp.float32, -lim_d, lim_d)
    return wn, bn, wg, bg, wo, bo


if __name__ == "__main__":
    # args.highway_number = 2 layers, input_size = 32, output_size = 16, batch = 8.
    num_layers, input_size, output_size, batch = 2, 32, 16, 8

    key = jax.random.PRNGKey(0)
    kx, kp = jax.random.split(key)
    x = jax.random.normal(kx, (batch, input_size), dtype=jnp.float32)
    wn, bn, wg, bg, wo, bo = init_params(kp, num_layers, input_size, output_size)

    params, blk = pack_params(wn, bn, wg, bg, wo, bo)

    out = highway_model(x, params, num_layers=num_layers,
                        output_size=output_size, blk=blk)
    out = jax.block_until_ready(out)

    # Reference 1: same bf16 weight quantization as the kernel, f32 accumulate.
    def bf(a):
        return a.astype(jnp.bfloat16)

    xr = x
    for l in range(num_layers):
        h = jnp.maximum(
            jnp.dot(bf(xr), bf(wn[l]), preferred_element_type=jnp.float32)
            + bf(bn[l]).astype(jnp.float32), 0.0)
        g = jax.nn.sigmoid(
            jnp.dot(bf(xr), bf(wg[l]), preferred_element_type=jnp.float32)
            + bf(bg[l]).astype(jnp.float32))
        xr = g * h + (1.0 - g) * xr
    ref_bf16 = jax.nn.softmax(
        jnp.dot(bf(xr), bf(wo), preferred_element_type=jnp.float32)
        + bf(bo).astype(jnp.float32), axis=-1)

    # Reference 2: full f32 (exact module semantics), looser bound covers bf16 quant.
    xf = x
    for l in range(num_layers):
        h = jnp.maximum(xf @ wn[l] + bn[l], 0.0)
        g = jax.nn.sigmoid(xf @ wg[l] + bg[l])
        xf = g * h + (1.0 - g) * xf
    ref_f32 = jax.nn.softmax(xf @ wo + bo, axis=-1)

    assert out.shape == (batch, output_size)
    assert jnp.allclose(jnp.sum(out, axis=-1), 1.0, atol=2e-3)
    assert jnp.allclose(out, ref_bf16, atol=5e-3, rtol=0.0)
    assert jnp.allclose(out, ref_f32, atol=3e-2, rtol=0.0)

    print("KERNEL_OK")
</pallas_src>

<mosaic_0001>
module attributes {stable_mosaic.version = 11 : i64} {
  func.func @kernel(%arg0: i32, %arg1: memref<8x32xf32, #tpu.memory_space<vmem>>, %arg2: memref<144x128xbf16, #tpu.memory_space<vmem>>, %arg3: memref<8x128xf32, #tpu.memory_space<vmem>>) attributes {dimension_semantics = [#tpu.dimension_semantics<parallel>], iteration_bounds = array<i64: 1>, scalar_prefetch = 0 : i64, scratch_operands = 0 : i64, tpu.core_type = #tpu.core_type<tc>, window_params = [{transform_indices = @transform_0, window_bounds = array<i64: 8, 32>}, {pipeline_mode = #tpu.pipeline_mode<synchronous>, transform_indices = @transform_1, window_bounds = array<i64: 144, 128>}, {transform_indices = @transform_2, window_bounds = array<i64: 8, 128>}]} {
    %c0 = arith.constant 0 : index
    %c0_0 = arith.constant 0 : index
    %0 = vector.load %arg1[%c0, %c0_0] : memref<8x32xf32, #tpu.memory_space<vmem>>, vector<8x32xf32>
    %1 = tpu.iota {dimensions = array<i32: 1>} : vector<8x16xi32>
    %c0_i32 = arith.constant 0 : i32
    %2 = vector.broadcast %c0_i32 : i32 to vector<8x16xi32>
    %3 = arith.cmpi eq, %1, %2 : vector<8x16xi32>
    %4 = arith.extui %3 : vector<8x16xi1> to vector<8x16xi32>
    %5 = arith.sitofp %4 : vector<8x16xi32> to vector<8x16xf32>
    %6 = arith.truncf %5 : vector<8x16xf32> to vector<8x16xbf16>
    %7 = tpu.iota {dimensions = array<i32: 1>} : vector<8x128xi32>
    %c16_i32 = arith.constant 16 : i32
    %8 = vector.broadcast %c16_i32 : i32 to vector<8x128xi32>
    %9 = arith.cmpi slt, %7, %8 : vector<8x128xi32>
    %c0_1 = arith.constant 0 : index
    %c0_2 = arith.constant 0 : index
    %10 = vector.load %arg2[%c0_1, %c0_2] : memref<144x128xbf16, #tpu.memory_space<vmem>>, vector<48x128xbf16>
    %11 = arith.truncf %0 : vector<8x32xf32> to vector<8x32xbf16>
    %12 = tpu.concatenate %11, %6 in 1 : vector<8x32xbf16>, vector<8x16xbf16> -> vector<8x48xbf16>
    %cst = arith.constant dense<0.000000e+00> : vector<8x128xf32>
    %13 = tpu.matmul %12, %10, %cst {dimension_numbers = #tpu.dot_dimension_numbers<[1], [0], [0], [1], [0, 0, 1, 1], [], []>} : vector<8x48xbf16>, vector<48x128xbf16>, vector<8x128xf32> -> vector<8x128xf32>
    %14 = vector.extract_strided_slice %13 {offsets = [0, 0], sizes = [8, 32], strides = [1, 1]} : vector<8x128xf32> to vector<8x32xf32>
    %cst_3 = arith.constant 0.000000e+00 : f32
    %15 = vector.broadcast %cst_3 : f32 to vector<8x32xf32>
    %16 = arith.maximumf %14, %15 : vector<8x32xf32>
    %17 = vector.extract_strided_slice %13 {offsets = [0, 32], sizes = [8, 32], strides = [1, 1]} : vector<8x128xf32> to vector<8x32xf32>
    %cst_4 = arith.constant 5.000000e-01 : f32
    %18 = vector.broadcast %cst_4 : f32 to vector<8x32xf32>
    %19 = arith.mulf %18, %17 : vector<8x32xf32>
    %20 = math.tanh %19 : vector<8x32xf32>
    %cst_5 = arith.constant 1.000000e+00 : f32
    %21 = vector.broadcast %cst_5 : f32 to vector<8x32xf32>
    %22 = arith.addf %20, %21 : vector<8x32xf32>
    %cst_6 = arith.constant 5.000000e-01 : f32
    %23 = vector.broadcast %cst_6 : f32 to vector<8x32xf32>
    %24 = arith.mulf %23, %22 : vector<8x32xf32>
    %25 = arith.mulf %24, %16 : vector<8x32xf32>
    %cst_7 = arith.constant 1.000000e+00 : f32
    %26 = vector.broadcast %cst_7 : f32 to vector<8x32xf32>
    %27 = arith.subf %26, %24 : vector<8x32xf32>
    %28 = arith.mulf %27, %0 : vector<8x32xf32>
    %29 = arith.addf %25, %28 : vector<8x32xf32>
    %c48 = arith.constant 48 : index
    %c0_8 = arith.constant 0 : index
    %30 = vector.load %arg2[%c48, %c0_8] : memref<144x128xbf16, #tpu.memory_space<vmem>>, vector<48x128xbf16>
    %31 = arith.truncf %29 : vector<8x32xf32> to vector<8x32xbf16>
    %32 = tpu.concatenate %31, %6 in 1 : vector<8x32xbf16>, vector<8x16xbf16> -> vector<8x48xbf16>
    %cst_9 = arith.constant dense<0.000000e+00> : vector<8x128xf32>
    %33 = tpu.matmul %32, %30, %cst_9 {dimension_numbers = #tpu.dot_dimension_numbers<[1], [0], [0], [1], [0, 0, 1, 1], [], []>} : vector<8x48xbf16>, vector<48x128xbf16>, vector<8x128xf32> -> vector<8x128xf32>
    %34 = vector.extract_strided_slice %33 {offsets = [0, 0], sizes = [8, 32], strides = [1, 1]} : vector<8x128xf32> to vector<8x32xf32>
    %cst_10 = arith.constant 0.000000e+00 : f32
    %35 = vector.broadcast %cst_10 : f32 to vector<8x32xf32>
    %36 = arith.maximumf %34, %35 : vector<8x32xf32>
    %37 = vector.extract_strided_slice %33 {offsets = [0, 32], sizes = [8, 32], strides = [1, 1]} : vector<8x128xf32> to vector<8x32xf32>
    %cst_11 = arith.constant 5.000000e-01 : f32
    %38 = vector.broadcast %cst_11 : f32 to vector<8x32xf32>
    %39 = arith.mulf %38, %37 : vector<8x32xf32>
    %40 = math.tanh %39 : vector<8x32xf32>
    %cst_12 = arith.constant 1.000000e+00 : f32
    %41 = vector.broadcast %cst_12 : f32 to vector<8x32xf32>
    %42 = arith.addf %40, %41 : vector<8x32xf32>
    %cst_13 = arith.constant 5.000000e-01 : f32
    %43 = vector.broadcast %cst_13 : f32 to vector<8x32xf32>
    %44 = arith.mulf %43, %42 : vector<8x32xf32>
    %45 = arith.mulf %44, %36 : vector<8x32xf32>
    %cst_14 = arith.constant 1.000000e+00 : f32
    %46 = vector.broadcast %cst_14 : f32 to vector<8x32xf32>
    %47 = arith.subf %46, %44 : vector<8x32xf32>
    %48 = arith.mulf %47, %29 : vector<8x32xf32>
    %49 = arith.addf %45, %48 : vector<8x32xf32>
    %c96 = arith.constant 96 : index
    %c0_15 = arith.constant 0 : index
    %50 = vector.load %arg2[%c96, %c0_15] : memref<144x128xbf16, #tpu.memory_space<vmem>>, vector<48x128xbf16>
    %51 = arith.truncf %49 : vector<8x32xf32> to vector<8x32xbf16>
    %52 = tpu.concatenate %51, %6 in 1 : vector<8x32xbf16>, vector<8x16xbf16> -> vector<8x48xbf16>
    %cst_16 = arith.constant dense<0.000000e+00> : vector<8x128xf32>
    %53 = tpu.matmul %52, %50, %cst_16 {dimension_numbers = #tpu.dot_dimension_numbers<[1], [0], [0], [1], [0, 0, 1, 1], [], []>} : vector<8x48xbf16>, vector<48x128xbf16>, vector<8x128xf32> -> vector<8x128xf32>
    %cst_17 = arith.constant 0xFF800000 : f32
    %54 = vector.broadcast %cst_17 : f32 to vector<8x128xf32>
    %55 = arith.select %9, %53, %54 : vector<8x128xi1>, vector<8x128xf32>
    %cst_18 = arith.constant dense<0xFF800000> : vector<8xf32>
    %56 = vector.multi_reduction <maximumf>, %55, %cst_18 [1] : vector<8x128xf32> to vector<8xf32>
    %57 = vector.shape_cast %56 : vector<8xf32> to vector<8x1xf32>
    %58 = vector.broadcast %57 : vector<8x1xf32> to vector<8x128xf32>
    %59 = arith.subf %55, %58 : vector<8x128xf32>
    %60 = math.exp %59 : vector<8x128xf32>
    %cst_19 = arith.constant dense<0.000000e+00> : vector<8xf32>
    %61 = vector.multi_reduction <add>, %60, %cst_19 [1] : vector<8x128xf32> to vector<8xf32>
    %62 = vector.shape_cast %61 : vector<8xf32> to vector<8x1xf32>
    %63 = tpu.reciprocal %62 {approx = true} : vector<8x1xf32> -> vector<8x1xf32>
    %64 = vector.broadcast %63 : vector<8x1xf32> to vector<8x128xf32>
    %65 = arith.mulf %60, %64 : vector<8x128xf32>
    %c0_20 = arith.constant 0 : index
    %c0_21 = arith.constant 0 : index
    %66 = vector.load %arg3[%c0_20, %c0_21] : memref<8x128xf32, #tpu.memory_space<vmem>>, vector<8x128xf32>
    tpu.vector_store %arg3[%c0_20, %c0_21], %65 {strides = array<i32>} : memref<8x128xf32, #tpu.memory_space<vmem>>, vector<8x128xf32>,
    return
  }
  func.func @transform_0(%arg0: i32) -> (i32, i32) {
    %c0_i32 = arith.constant 0 : i32
    %c0_i32_0 = arith.constant 0 : i32
    return %arg0, %c0_i32 : i32, i32
  }
  func.func @transform_1(%arg0: i32) -> (i32, i32) {
    %c0_i32 = arith.constant 0 : i32
    %c0_i32_0 = arith.constant 0 : i32
    %c0_i32_1 = arith.constant 0 : i32
    return %c0_i32, %c0_i32_0 : i32, i32
  }
  func.func @transform_2(%arg0: i32) -> (i32, i32) {
    %c0_i32 = arith.constant 0 : i32
    %c0_i32_0 = arith.constant 0 : i32
    return %arg0, %c0_i32 : i32, i32
  }
}

</mosaic_0001>

<llo_original>
// kernel: tpu_custom_call.1
$region0: #{tpu_custom_call.1}
  #allocation0 [shape = 'u32[]', space=smem, size = 0x4, offset = 0x4, fixed_abs, tag = 'smem constant byte address 0x4 - core index']
  #allocation1 [shape = 'u32[72,128]{1,0:T(1,128)}', space=vmem, size = 0x9000, scoped, tag = 'internal scratch']
  %s0 = inlined_call_operand.hbm [shape: f32[8,32], index: 0, kind: input, shape index: {}]
  %s1 = inlined_call_operand.hbm [shape: bf16[144,128], index: 1, kind: input, shape index: {}]
  %s2 = inlined_call_operand.hbm [shape: f32[8,128], index: 2, kind: output, shape index: {}]
  %s3 = sld [smem:[#allocation0]]
  $region26: #{tpu_custom_call.1} parent=0
    _
  %s5 = ssub.s32 1, %s3
  %s6 = scalar_select 0, %s5, %s3
  $region1: #{tpu_custom_call.1} parent=0
    #allocation2 [shape = 'u8[4096]{0}', space=vmem, size = 0x1000, scoped, tag = 'input window, operand 0, single buffered']
    #allocation3 [shape = 's32[1]{0}', space=sflag, size = 0x4, scoped, tag = 'scoped memory for tpu_custom_call.1']
    #allocation4 [shape = 's32[1]{0}', space=sflag, size = 0x4, scoped, tag = 'scoped memory for tpu_custom_call.1']
    #allocation5 [shape = 'u8[36864]{0}', space=vmem, size = 0x9000, scoped, tag = 'input window, operand 1, single buffered']
    #allocation6 [shape = 's32[1]{0}', space=sflag, size = 0x4, scoped, tag = 'scoped memory for tpu_custom_call.1']
    #allocation7 [shape = 'u8[4096]{0}', space=vmem, size = 0x1000, scoped, tag = 'output window, operand 0, single buffered']
    %7 = vsyncpa [#allocation3], 0
    %8 = vsyncpa [#allocation6], 0
    %9 = vsyncpa [#allocation4], 0
    // Predicated region
    $region2: #{tpu_custom_call.1} parent=1 // pred_check
      _
    $region3: #{tpu_custom_call.1} parent=1 // pred_check_branch
      %11 = sbr.rel (0) target = $region5
    $region4: #{tpu_custom_call.1} parent=1 // pred_region
      %13 = vsyncadd [#allocation3], 0
      %s15 = sshll.u32 %s0, 4
      %s16 = int_to_ptr.hbm [resolvable:$true] %s15
      %s17 = sshll.u32 [#allocation2], 4
      %s18 = int_to_ptr.vmem [resolvable:$true] %s17
      %20 = dma.hbm_to_vmem [thread:$0]  %s16, 128, %s18, [#allocation3]
    $region5: #{tpu_custom_call.1} parent=1 // pred_fallthru
      _
    // Predicated region
    $region6: #{tpu_custom_call.1} parent=1 // pred_check
      _
    $region7: #{tpu_custom_call.1} parent=1 // pred_check_branch
      %22 = sbr.rel (0) target = $region9
    $region8: #{tpu_custom_call.1} parent=1 // pred_region
      %24 = vsyncadd [#allocation6], 0
      %s25 = sshll.u32 %s1, 4
      %s26 = int_to_ptr.hbm [resolvable:$true] %s25
      %s27 = sshll.u32 [#allocation5], 4
      %s28 = int_to_ptr.vmem [resolvable:$true] %s27
      %33 = dma.hbm_to_vmem [thread:$0]  %s26, 1152, %s28, [#allocation6], 64, 64, 4
    $region9: #{tpu_custom_call.1} parent=1 // pred_fallthru
      _
    // Predicated region
    $region10: #{tpu_custom_call.1} parent=1 // pred_check
      _
    $region11: #{tpu_custom_call.1} parent=1 // pred_check_branch
      %35 = sbr.rel (0) target = $region13
    $region12: #{tpu_custom_call.1} parent=1 // pred_region
      %37 = dma.done [#allocation3], 128
    $region13: #{tpu_custom_call.1} parent=1 // pred_fallthru
      _
    // Predicated region
    $region14: #{tpu_custom_call.1} parent=1 // pred_check
      _
    $region15: #{tpu_custom_call.1} parent=1 // pred_check_branch
      %39 = sbr.rel (0) target = $region17
    $region16: #{tpu_custom_call.1} parent=1 // pred_region
      %41 = dma.done [#allocation6], 1152
    $region17: #{tpu_custom_call.1} parent=1 // pred_fallthru
      _
    %v43 = vld [vmem:[#allocation2] sm:$0xff]
    %v44 = vlaneseq
    %v45 = vand.u32 %v44, 127
    %vm46 = vcmp.eq.s32.totalorder %v45, 0
    %v47 = vsel %vm46, 1, 0
    %v48 = vcvt.s32.f32 %v47
    %v49 = vpack.c.bf16 %v48, %v48
    %vm50 = vcmp.lt.s32.totalorder %v45, 16
    %v51 = vld [vmem:[#allocation5] sm:$0xf]
    %v52 = vld [vmem:[#allocation5 + $0x4] sm:$0xf]
    %v53 = vld [vmem:[#allocation5 + $0x8] sm:$0xf]
    %v54 = vld [vmem:[#allocation5 + $0xc] sm:$0xf]
    %v55 = vld [vmem:[#allocation5 + $0x10] sm:$0xf]
    %v56 = vld [vmem:[#allocation5 + $0x14] sm:$0xf]
    %v57 = vpack.c.bf16 %v43, %v43
    %v59 = vperm.slane %v49, 0
    %60 = vrot.lane.b32.xlu0 %v59, 32
    %v61 = vpop.permute.xlu0 %60
    %vm62 = vcmask 261120
    %v65 = vsel %vm62, %v57, %v61
    %v72 = vunpack.c.l.b16 %v51
    %v73 = vunpack.c.l.b16 %v52
    %v74 = vunpack.c.l.b16 %v53
    %v75 = vunpack.c.l.b16 %v54
    %v76 = vunpack.c.l.b16 %v55
    %v77 = vunpack.c.l.b16 %v56
    %v78 = vpack.c.b16 %v73, %v72
    %v79 = vpack.c.b16 %v75, %v74
    %v80 = vpack.c.b16 %v77, %v76
    %vm84 = vcmask 392192
    %v85 = vsel %vm84, %v65, 0
    %87 = vmatpush.bf16.msra.mxu0 0
    %88 = vmatpush.bf16.msra.mxu0 0
    %89 = vmatpush.bf16.msra.mxu0 0
    %90 = vmatpush.bf16.msra.mxu0 0
    %91 = vmatpush.bf16.msra.mxu0 0
    %92 = vmatpush.bf16.msra.mxu0 %v80
    %93 = vmatpush.bf16.msra.mxu0 %v79
    %94 = vmatpush.bf16.msra.mxu0 %v78
    %95 = vmatmul.bf16.gmra.mxu0 %v85
    %v96 = vpop.f32.mrf.mxu0
    %v97 = vadd.f32 0.0, %v96
    %v98 = vpop.f32.mrf.mxu0
    %99 = vdwg.mxu0
    %v100 = vmax.f32 %v97, 0.0
    %v101 = vmul.f32 %v97, 0.5
    %v102 = vtanh.pop %v101
    %v103 = vadd.f32 %v102, 1.0
    %v104 = vmul.f32 %v103, 0.5
    %106 = vrot.lane.b32.xlu0 %v100, 32
    %v107 = vpop.permute.xlu0 %106
    %v109 = vmul.f32 %v104, %v107
    %v110 = vsub.f32 1.0, %v104
    %112 = vrot.lane.b32.xlu0 %v43, 32
    %v113 = vpop.permute.xlu0 %112
    %v115 = vmul.f32 %v110, %v113
    %v116 = vadd.f32 %v109, %v115
    %v117 = vld [vmem:[#allocation5 + $0x18] sm:$0xf]
    %v118 = vld [vmem:[#allocation5 + $0x1c] sm:$0xf]
    %v119 = vld [vmem:[#allocation5 + $0x20] sm:$0xf]
    %v120 = vld [vmem:[#allocation5 + $0x24] sm:$0xf]
    %v121 = vld [vmem:[#allocation5 + $0x28] sm:$0xf]
    %v122 = vld [vmem:[#allocation5 + $0x2c] sm:$0xf]
    %v123 = vpack.c.bf16 %v116, %v116
    %v125 = vunpack.c.l.b16 %v123
    %v126 = vpack.c.b16 %v125, %v125
    %127 = vrot.lane.b32.xlu0 %v126, 96
    %v128 = vpop.permute.xlu0 %127
    %v130 = vsel %vm62, %v128, %v61
    %v137 = vunpack.c.l.b16 %v117
    %v138 = vunpack.c.l.b16 %v118
    %v139 = vunpack.c.l.b16 %v119
    %v140 = vunpack.c.l.b16 %v120
    %v141 = vunpack.c.l.b16 %v121
    %v142 = vunpack.c.l.b16 %v122
    %v143 = vpack.c.b16 %v138, %v137
    %v144 = vpack.c.b16 %v140, %v139
    %v145 = vpack.c.b16 %v142, %v141
    %v149 = vsel %vm84, %v130, 0
    %151 = vmatpush.bf16.msra.mxu0 0
    %152 = vmatpush.bf16.msra.mxu0 0
    %153 = vmatpush.bf16.msra.mxu0 0
    %154 = vmatpush.bf16.msra.mxu0 0
    %155 = vmatpush.bf16.msra.mxu0 0
    %156 = vmatpush.bf16.msra.mxu0 %v145
    %157 = vmatpush.bf16.msra.mxu0 %v144
    %158 = vmatpush.bf16.msra.mxu0 %v143
    %159 = vmatmul.bf16.gmra.mxu0 %v149
    %v160 = vpop.f32.mrf.mxu0
    %v161 = vadd.f32 0.0, %v160
    %v162 = vpop.f32.mrf.mxu0
    %163 = vdwg.mxu0
    %v164 = vmax.f32 %v161, 0.0
    %v165 = vmul.f32 %v161, 0.5
    %v166 = vtanh.pop %v165
    %v167 = vadd.f32 %v166, 1.0
    %v168 = vmul.f32 %v167, 0.5
    %170 = vrot.lane.b32.xlu0 %v164, 32
    %v171 = vpop.permute.xlu0 %170
    %v173 = vmul.f32 %v168, %v171
    %v174 = vsub.f32 1.0, %v168
    %v175 = vmul.f32 %v174, %v116
    %v176 = vadd.f32 %v173, %v175
    %v177 = vld [vmem:[#allocation5 + $0x30] sm:$0xf]
    %v178 = vld [vmem:[#allocation5 + $0x34] sm:$0xf]
    %v179 = vld [vmem:[#allocation5 + $0x38] sm:$0xf]
    %v180 = vld [vmem:[#allocation5 + $0x3c] sm:$0xf]
    %v181 = vld [vmem:[#allocation5 + $0x40] sm:$0xf]
    %v182 = vld [vmem:[#allocation5 + $0x44] sm:$0xf]
    %v183 = vpack.c.bf16 %v176, %v176
    %v185 = vunpack.c.l.b16 %v183
    %v186 = vpack.c.b16 %v185, %v185
    %187 = vrot.lane.b32.xlu0 %v186, 96
    %v188 = vpop.permute.xlu0 %187
    %v190 = vsel %vm62, %v188, %v61
    %v197 = vunpack.c.l.b16 %v177
    %v198 = vunpack.c.l.b16 %v178
    %v199 = vunpack.c.l.b16 %v179
    %v200 = vunpack.c.l.b16 %v180
    %v201 = vunpack.c.l.b16 %v181
    %v202 = vunpack.c.l.b16 %v182
    %v203 = vpack.c.b16 %v198, %v197
    %v204 = vpack.c.b16 %v200, %v199
    %v205 = vpack.c.b16 %v202, %v201
    %v209 = vsel %vm84, %v190, 0
    %211 = vmatpush.bf16.msra.mxu0 0
    %212 = vmatpush.bf16.msra.mxu0 0
    %213 = vmatpush.bf16.msra.mxu0 0
    %214 = vmatpush.bf16.msra.mxu0 0
    %215 = vmatpush.bf16.msra.mxu0 0
    %216 = vmatpush.bf16.msra.mxu0 %v205
    %217 = vmatpush.bf16.msra.mxu0 %v204
    %218 = vmatpush.bf16.msra.mxu0 %v203
    %219 = vmatmul.bf16.gmra.mxu0 %v209
    %v220 = vpop.f32.mrf.mxu0
    %v221 = vadd.f32 0.0, %v220
    %v222 = vpop.f32.mrf.mxu0
    %223 = vdwg.mxu0
    %v224 = vsel %vm50, %v221, -inf
    %225 = vmax.xlane.f32.xlu0 %v224
    %v226 = vpop.xlane.xlu0 %225
    %v227 = vsub.f32 %v224, %v226
    %v228 = vmul.f32 %v227, 1.442695
    %v229 = vpow.pop %v228
    %230 = vadd.xlane.f32.xlu0 %v229
    %v231 = vpop.xlane.xlu0 %230
    %v232 = vrcp.pop %v231
    %v233 = vmul.f32 %v229, %v232
    %234 = vst [vmem:[#allocation7] sm:$0xff] %v233
    // Predicated region
    $region18: #{tpu_custom_call.1} parent=1 // pred_check
      _
    $region19: #{tpu_custom_call.1} parent=1 // pred_check_branch
      %236 = sbr.rel (0) target = $region21
    $region20: #{tpu_custom_call.1} parent=1 // pred_region
      %238 = vsyncadd [#allocation4], 0
      %s240 = sshll.u32 [#allocation7], 4
      %s241 = int_to_ptr.vmem [resolvable:$true] %s240
      %s242 = sshll.u32 %s2, 4
      %s243 = int_to_ptr.hbm [resolvable:$true] %s242
      %245 = dma.vmem_to_hbm [thread:$0]  %s241, 128, %s243, [#allocation4]
    $region21: #{tpu_custom_call.1} parent=1 // pred_fallthru
      _
    // Predicated region
    $region22: #{tpu_custom_call.1} parent=1 // pred_check
      _
    $region23: #{tpu_custom_call.1} parent=1 // pred_check_branch
      %247 = sbr.rel (0) target = $region25
    $region24: #{tpu_custom_call.1} parent=1 // pred_region
      %249 = dma.done [#allocation4], 128
    $region25: #{tpu_custom_call.1} parent=1 // pred_fallthru
      _
    %250 = vsyncpa [#allocation3], 1
    %251 = vsyncpa [#allocation6], 1
    %252 = vsyncpa [#allocation4], 1

</llo_original>
